<compile_context>
chip_gen: v5e
topology: v5e:2x2
jax: 0.10.0
libtpu: 0.0.40
codegen_flags: <defaults>
</compile_context>

<pallas_src>
import functools

import jax
import jax.numpy as jnp
from jax.experimental import pallas as pl
from jax.experimental.pallas import tpu as pltpu


def _eca_kernel(x_ref, w_ref, b_ref, o_ref, pmean_ref, *, inv_s, taps, conv_pad):
    """One grid step processes `Bt` batch rows.

    x_ref     : (Bt, C, Sp)  input block (streamed, double-buffered)
    w_ref     : (k,)   f32   Conv1d taps in SMEM
    b_ref     : (1,)   f32   Conv1d bias in SMEM
    o_ref     : (Bt, C, Sp)  output block
    pmean_ref : (Bt, C + 2*conv_pad, 1) f32 VMEM scratch (zero-padded means)
    """
    bt, c, _ = x_ref.shape

    # 1) Global average pool along the spatial (lane) axis, f32 accumulation.
    #    Read the ref inside the reduce so any upcast fuses per-vreg.
    mean = jnp.sum(x_ref[...], axis=-1, dtype=jnp.float32, keepdims=True) * inv_s  # (Bt, C, 1)

    # 2) k-tap 1-D conv along the channel (sublane) axis:
    #    logits[c] = bias + sum_i w[i] * mean[c + i - p], zeros outside [0, C).
    #    Write the means into a zero-padded scratch and take k static slices.
    pmean_ref[...] = jnp.zeros_like(pmean_ref)
    pmean_ref[:, conv_pad:conv_pad + c, :] = mean
    logits = jnp.zeros_like(mean) + b_ref[0]
    for i in range(taps):
        logits = logits + w_ref[i] * pmean_ref[:, i:i + c, :]

    # 3) Sigmoid gate (EUP exp path) and per-channel gating, broadcast over
    #    the lane (spatial) axis.  Gate is cast to the activation dtype so the
    #    big multiply stays bf16 when the inputs are bf16.
    gate = 1.0 / (1.0 + jnp.exp(-logits))                     # (Bt, C, 1) f32
    o_ref[...] = (x_ref[...] * gate.astype(x_ref.dtype)).astype(o_ref.dtype)


def _pick_batch_tile(batch, row_bytes):
    """Smallest divisor of `batch` whose block moves >= ~2 MiB per direction,
    capped so 2 input + 2 output double-buffered blocks stay within ~40 MiB."""
    target = 2 * 1024 * 1024
    budget = 40 * 1024 * 1024
    cap = max(1, budget // (4 * row_bytes))
    best = 1
    for bt in range(1, batch + 1):
        if batch % bt:
            continue
        if bt > cap:
            break
        best = bt
        if bt * row_bytes >= target:
            break
    return best


def eca_attention(x, conv_weight, conv_bias):
    """x: (B, C, H, W); conv_weight: (k,) Conv1d(1, 1, k) taps; conv_bias: scalar.
    Returns x * sigmoid(conv1d_channels(gap(x))), same shape/dtype as x."""
    B, C, H, W = x.shape
    S = H * W
    w = jnp.asarray(conv_weight, dtype=jnp.float32).reshape(-1)
    k = int(w.shape[0])
    assert k % 2 == 1, "ECA Conv1d kernel size must be odd for 'same' output length"
    p = (k - 1) // 2
    bias = jnp.asarray(conv_bias, dtype=jnp.float32).reshape(1)

    x3 = x.reshape(B, C, S)

    # Lane density: pad spatial axis to a multiple of 128 (unmasked full-lane
    # stores).  Zero padding leaves the mean untouched (divide by true S).
    Sp = S if S % 128 == 0 else ((S + 127) // 128) * 128
    if Sp != S:
        x3 = jnp.pad(x3, ((0, 0), (0, 0), (0, Sp - S)))

    itemsize = jnp.dtype(x3.dtype).itemsize
    row_bytes = C * Sp * itemsize
    bt = _pick_batch_tile(B, row_bytes)
    grid = (B // bt,)

    # Explicit scoped-VMEM budget: 2 in + 2 out double-buffered blocks,
    # the tiny conv scratch, and some compiler slack.
    block_bytes = bt * row_bytes
    scratch_bytes = bt * (C + 2 * p) * 4
    needed = 4 * block_bytes + scratch_bytes + (2 << 20)
    vmem_limit = int(min(max(needed, 32 * 1024 * 1024), 96 * 1024 * 1024))

    kernel = functools.partial(_eca_kernel, inv_s=1.0 / S, taps=k, conv_pad=p)

    out = pl.pallas_call(
        kernel,
        out_shape=jax.ShapeDtypeStruct((B, C, Sp), x.dtype),
        grid=grid,
        in_specs=[
            pl.BlockSpec((bt, C, Sp), lambda b: (b, 0, 0)),      # x, streamed
            pl.BlockSpec(memory_space=pltpu.MemorySpace.SMEM),   # conv taps
            pl.BlockSpec(memory_space=pltpu.MemorySpace.SMEM),   # conv bias
        ],
        out_specs=pl.BlockSpec((bt, C, Sp), lambda b: (b, 0, 0)),
        scratch_shapes=[pltpu.VMEM((bt, C + 2 * p, 1), jnp.float32)],
        compiler_params=pltpu.CompilerParams(
            # On v7x, verify both TensorCores stream; switch to CORE_PARALLEL
            # if a profile shows one core idle.
            dimension_semantics=("parallel",),
            vmem_limit_bytes=vmem_limit,
        ),
    )(x3, w, bias)

    if Sp != S:
        out = out[:, :, :S]
    return out.reshape(B, C, H, W)


def _reference(x, w, b):
    """Pure-JAX reference mirroring the PyTorch ECAAttention forward."""
    B, C, H, W = x.shape
    k = w.shape[0]
    p = (k - 1) // 2
    y = jnp.mean(x, axis=(2, 3))                              # (B, C)
    ypad = jnp.pad(y, ((0, 0), (p, p)))
    logits = b + sum(w[i] * ypad[:, i:i + C] for i in range(k))
    gate = jax.nn.sigmoid(logits)                             # (B, C)
    return x * gate[:, :, None, None]


if __name__ == "__main__":
    key = jax.random.PRNGKey(0)
    B, C, H, W = 2, 32, 16, 16
    k = 5

    kx, kw, kb = jax.random.split(key, 3)
    x = jax.random.normal(kx, (B, C, H, W), dtype=jnp.float32)
    conv_w = jax.random.normal(kw, (k,), dtype=jnp.float32) * 0.3
    conv_b = jax.random.normal(kb, (), dtype=jnp.float32) * 0.1

    out = eca_attention(x, conv_w, conv_b)
    out = jax.block_until_ready(out)

    ref = _reference(x, conv_w, conv_b)
    assert out.shape == x.shape
    err = float(jnp.max(jnp.abs(out - ref)))
    assert jnp.allclose(out, ref, atol=1e-5, rtol=1e-5), f"max abs err {err}"
    print("KERNEL_OK")
</pallas_src>

<mosaic_0001>
module attributes {stable_mosaic.version = 11 : i64} {
  func.func @_eca_kernel(%arg0: i32, %arg1: memref<2x32x256xf32, #tpu.memory_space<vmem>>, %arg2: memref<5xf32, #tpu.memory_space<smem>>, %arg3: memref<1xf32, #tpu.memory_space<smem>>, %arg4: memref<2x32x256xf32, #tpu.memory_space<vmem>>, %arg5: memref<2x36x1xf32, #tpu.memory_space<vmem>>) attributes {dimension_semantics = [#tpu.dimension_semantics<parallel>], iteration_bounds = array<i64: 1>, scalar_prefetch = 0 : i64, scratch_operands = 1 : i64, tpu.core_type = #tpu.core_type<tc>, window_params = [{transform_indices = @transform_0, window_bounds = array<i64: 2, 32, 256>}, {transform_indices = @transform_1, window_bounds = array<i64: 5>}, {transform_indices = @transform_2, window_bounds = array<i64: 1>}, {transform_indices = @transform_3, window_bounds = array<i64: 2, 32, 256>}]} {
    %c0 = arith.constant 0 : index
    %c0_0 = arith.constant 0 : index
    %c0_1 = arith.constant 0 : index
    %0 = vector.load %arg1[%c0, %c0_0, %c0_1] : memref<2x32x256xf32, #tpu.memory_space<vmem>>, vector<2x32x256xf32>
    %cst = arith.constant dense<0.000000e+00> : vector<2x32xf32>
    %1 = vector.multi_reduction <add>, %0, %cst [2] : vector<2x32x256xf32> to vector<2x32xf32>
    %2 = vector.shape_cast %1 : vector<2x32xf32> to vector<2x32x1xf32>
    %cst_2 = arith.constant 3.906250e-03 : f32
    %3 = vector.broadcast %cst_2 : f32 to vector<2x32x1xf32>
    %4 = arith.mulf %2, %3 : vector<2x32x1xf32>
    %cst_3 = arith.constant 0.000000e+00 : f32
    %5 = vector.broadcast %cst_3 : f32 to vector<2x36x1xf32>
    %c0_4 = arith.constant 0 : index
    %c0_5 = arith.constant 0 : index
    %c0_6 = arith.constant 0 : index
    %6 = vector.load %arg5[%c0_4, %c0_5, %c0_6] : memref<2x36x1xf32, #tpu.memory_space<vmem>>, vector<2x36x1xf32>
    tpu.vector_store %arg5[%c0_4, %c0_5, %c0_6], %5 {strides = array<i32>} : memref<2x36x1xf32, #tpu.memory_space<vmem>>, vector<2x36x1xf32>,
    %c0_7 = arith.constant 0 : index
    %c2 = arith.constant 2 : index
    %c0_8 = arith.constant 0 : index
    %7 = vector.load %arg5[%c0_7, %c2, %c0_8] : memref<2x36x1xf32, #tpu.memory_space<vmem>>, vector<2x32x1xf32>
    tpu.vector_store %arg5[%c0_7, %c2, %c0_8], %4 {strides = array<i32>} : memref<2x36x1xf32, #tpu.memory_space<vmem>>, vector<2x32x1xf32>,
    %cst_9 = arith.constant 0.000000e+00 : f32
    %8 = vector.broadcast %cst_9 : f32 to vector<2x32x1xf32>
    %c0_10 = arith.constant 0 : index
    %9 = memref.load %arg3[%c0_10] : memref<1xf32, #tpu.memory_space<smem>>
    %10 = vector.broadcast %9 : f32 to vector<2x32x1xf32>
    %11 = arith.addf %8, %10 : vector<2x32x1xf32>
    %c0_11 = arith.constant 0 : index
    %12 = memref.load %arg2[%c0_11] : memref<5xf32, #tpu.memory_space<smem>>
    %c0_12 = arith.constant 0 : index
    %c0_13 = arith.constant 0 : index
    %c0_14 = arith.constant 0 : index
    %13 = vector.load %arg5[%c0_12, %c0_13, %c0_14] : memref<2x36x1xf32, #tpu.memory_space<vmem>>, vector<2x32x1xf32>
    %14 = vector.broadcast %12 : f32 to vector<2x32x1xf32>
    %15 = arith.mulf %14, %13 : vector<2x32x1xf32>
    %16 = arith.addf %11, %15 : vector<2x32x1xf32>
    %c1 = arith.constant 1 : index
    %17 = memref.load %arg2[%c1] : memref<5xf32, #tpu.memory_space<smem>>
    %c0_15 = arith.constant 0 : index
    %c1_16 = arith.constant 1 : index
    %c0_17 = arith.constant 0 : index
    %18 = vector.load %arg5[%c0_15, %c1_16, %c0_17] : memref<2x36x1xf32, #tpu.memory_space<vmem>>, vector<2x32x1xf32>
    %19 = vector.broadcast %17 : f32 to vector<2x32x1xf32>
    %20 = arith.mulf %19, %18 : vector<2x32x1xf32>
    %21 = arith.addf %16, %20 : vector<2x32x1xf32>
    %c2_18 = arith.constant 2 : index
    %22 = memref.load %arg2[%c2_18] : memref<5xf32, #tpu.memory_space<smem>>
    %c0_19 = arith.constant 0 : index
    %c2_20 = arith.constant 2 : index
    %c0_21 = arith.constant 0 : index
    %23 = vector.load %arg5[%c0_19, %c2_20, %c0_21] : memref<2x36x1xf32, #tpu.memory_space<vmem>>, vector<2x32x1xf32>
    %24 = vector.broadcast %22 : f32 to vector<2x32x1xf32>
    %25 = arith.mulf %24, %23 : vector<2x32x1xf32>
    %26 = arith.addf %21, %25 : vector<2x32x1xf32>
    %c3 = arith.constant 3 : index
    %27 = memref.load %arg2[%c3] : memref<5xf32, #tpu.memory_space<smem>>
    %c0_22 = arith.constant 0 : index
    %c3_23 = arith.constant 3 : index
    %c0_24 = arith.constant 0 : index
    %28 = vector.load %arg5[%c0_22, %c3_23, %c0_24] : memref<2x36x1xf32, #tpu.memory_space<vmem>>, vector<2x32x1xf32>
    %29 = vector.broadcast %27 : f32 to vector<2x32x1xf32>
    %30 = arith.mulf %29, %28 : vector<2x32x1xf32>
    %31 = arith.addf %26, %30 : vector<2x32x1xf32>
    %c4 = arith.constant 4 : index
    %32 = memref.load %arg2[%c4] : memref<5xf32, #tpu.memory_space<smem>>
    %c0_25 = arith.constant 0 : index
    %c4_26 = arith.constant 4 : index
    %c0_27 = arith.constant 0 : index
    %33 = vector.load %arg5[%c0_25, %c4_26, %c0_27] : memref<2x36x1xf32, #tpu.memory_space<vmem>>, vector<2x32x1xf32>
    %34 = vector.broadcast %32 : f32 to vector<2x32x1xf32>
    %35 = arith.mulf %34, %33 : vector<2x32x1xf32>
    %36 = arith.addf %31, %35 : vector<2x32x1xf32>
    %cst_28 = arith.constant 0.000000e+00 : f32
    %37 = vector.broadcast %cst_28 : f32 to vector<2x32x1xf32>
    %38 = arith.subf %37, %36 : vector<2x32x1xf32>
    %39 = math.exp %38 : vector<2x32x1xf32>
    %cst_29 = arith.constant 1.000000e+00 : f32
    %40 = vector.broadcast %cst_29 : f32 to vector<2x32x1xf32>
    %41 = arith.addf %40, %39 : vector<2x32x1xf32>
    %cst_30 = arith.constant 1.000000e+00 : f32
    %42 = vector.broadcast %cst_30 : f32 to vector<2x32x1xf32>
    %43 = arith.divf %42, %41 : vector<2x32x1xf32>
    %c0_31 = arith.constant 0 : index
    %c0_32 = arith.constant 0 : index
    %c0_33 = arith.constant 0 : index
    %44 = vector.load %arg1[%c0_31, %c0_32, %c0_33] : memref<2x32x256xf32, #tpu.memory_space<vmem>>, vector<2x32x256xf32>
    %45 = vector.broadcast %43 : vector<2x32x1xf32> to vector<2x32x256xf32>
    %46 = arith.mulf %44, %45 : vector<2x32x256xf32>
    %c0_34 = arith.constant 0 : index
    %c0_35 = arith.constant 0 : index
    %c0_36 = arith.constant 0 : index
    %47 = vector.load %arg4[%c0_34, %c0_35, %c0_36] : memref<2x32x256xf32, #tpu.memory_space<vmem>>, vector<2x32x256xf32>
    tpu.vector_store %arg4[%c0_34, %c0_35, %c0_36], %46 {strides = array<i32>} : memref<2x32x256xf32, #tpu.memory_space<vmem>>, vector<2x32x256xf32>,
    return
  }
  func.func @transform_0(%arg0: i32) -> (i32, i32, i32) {
    %c0_i32 = arith.constant 0 : i32
    %c0_i32_0 = arith.constant 0 : i32
    %c0_i32_1 = arith.constant 0 : i32
    return %arg0, %c0_i32, %c0_i32_0 : i32, i32, i32
  }
  func.func @transform_1(%arg0: i32) -> i32 {
    %c0_i32 = arith.constant 0 : i32
    %c0_i32_0 = arith.constant 0 : i32
    return %c0_i32 : i32
  }
  func.func @transform_2(%arg0: i32) -> i32 {
    %c0_i32 = arith.constant 0 : i32
    %c0_i32_0 = arith.constant 0 : i32
    return %c0_i32 : i32
  }
  func.func @transform_3(%arg0: i32) -> (i32, i32, i32) {
    %c0_i32 = arith.constant 0 : i32
    %c0_i32_0 = arith.constant 0 : i32
    %c0_i32_1 = arith.constant 0 : i32
    return %arg0, %c0_i32, %c0_i32_0 : i32, i32, i32
  }
}

</mosaic_0001>

<llo_original>
// kernel: tpu_custom_call.1
$region0: #{tpu_custom_call.1}
  #allocation0 [shape = 'u32[]', space=smem, size = 0x4, offset = 0x4, fixed_abs, tag = 'smem constant byte address 0x4 - core index']
  #allocation1 [shape = 'u32[72,128]{1,0:T(1,128)}', space=vmem, size = 0x9000, scoped, tag = 'internal scratch']
  #allocation2 [shape = 'f32[2,36,1]{2,1,0:T(8,128)}', space=vmem, size = 0xa000, scoped, tag = 'scratch operand']
  #allocation3 [shape = 'f32[1]{0:T(128)S(6)}', space=smem, size = 0x200, scoped, tag = 'scoped memory for tpu_custom_call.1']
  %s0 = inlined_call_operand.hbm [shape: f32[2,32,256], index: 0, kind: input, shape index: {}]
  %s1 = inlined_call_operand.vmem [shape: f32[5], index: 1, kind: input, shape index: {}]
  %s2 = inlined_call_operand.<no memory space> [shape: f32[1], index: 2, kind: input, shape index: {}]
  %s3 = inlined_call_operand.hbm [shape: f32[2,32,256], index: 3, kind: output, shape index: {}]
  %s4 = sld [smem:[#allocation0]]
  $region30: #{tpu_custom_call.1} parent=0
    _
  %s6 = ssub.s32 1, %s4
  %s7 = scalar_select 0, %s6, %s4
  %8 = sst [smem:[#allocation3]] %s2
  $region1: #{tpu_custom_call.1} parent=0
    #allocation4 [shape = 'u8[65536]{0}', space=vmem, size = 0x10000, scoped, tag = 'input window, operand 0, single buffered']
    #allocation5 [shape = 's32[1]{0}', space=sflag, size = 0x4, scoped, tag = 'scoped memory for tpu_custom_call.1']
    #allocation6 [shape = 's32[1]{0}', space=sflag, size = 0x4, scoped, tag = 'scoped memory for tpu_custom_call.1']
    #allocation7 [shape = 's32[1]{0}', space=sflag, size = 0x4, scoped, tag = 'scoped memory for tpu_custom_call.1']
    #allocation8 [shape = 'u8[512]{0}', space=smem, size = 0x200, scoped, tag = 'input window, operand 1, single buffered']
    #allocation9 [shape = 'u8[65536]{0}', space=vmem, size = 0x10000, scoped, tag = 'output window, operand 0, single buffered']
    %9 = vsyncpa [#allocation5], 0
    %10 = vsyncpa [#allocation7], 0
    %11 = vsyncpa [#allocation6], 0
    // Predicated region
    $region2: #{tpu_custom_call.1} parent=1 // pred_check
      _
    $region3: #{tpu_custom_call.1} parent=1 // pred_check_branch
      %13 = sbr.rel (0) target = $region5
    $region4: #{tpu_custom_call.1} parent=1 // pred_region
      %15 = vsyncadd [#allocation5], 0
      %s16 = sshll.u32 %s0, 4
      %s17 = int_to_ptr.hbm [resolvable:$true] %s16
      %s18 = sshll.u32 [#allocation4], 4
      %s19 = int_to_ptr.vmem [resolvable:$true] %s18
      %24 = dma.hbm_to_vmem [thread:$0]  %s17, 2048, %s19, [#allocation5], 256, 256, 16
    $region5: #{tpu_custom_call.1} parent=1 // pred_fallthru
      _
    // Predicated region
    $region6: #{tpu_custom_call.1} parent=1 // pred_check
      _
    $region7: #{tpu_custom_call.1} parent=1 // pred_check_branch
      %26 = sbr.rel (0) target = $region9
    $region8: #{tpu_custom_call.1} parent=1 // pred_region
      %28 = vsyncadd [#allocation7], 0
      %s30 = sshll.u32 %s1, 4
      %s31 = int_to_ptr.vmem [resolvable:$true] %s30
      %33 = dma.vmem_to_smem %s31, 16, [#allocation8], [#allocation7]
    $region9: #{tpu_custom_call.1} parent=1 // pred_fallthru
      _
    // Predicated region
    $region10: #{tpu_custom_call.1} parent=1 // pred_check
      _
    $region11: #{tpu_custom_call.1} parent=1 // pred_check_branch
      %35 = sbr.rel (0) target = $region13
    $region12: #{tpu_custom_call.1} parent=1 // pred_region
      _
    $region13: #{tpu_custom_call.1} parent=1 // pred_fallthru
      _
    // Predicated region
    $region14: #{tpu_custom_call.1} parent=1 // pred_check
      _
    $region15: #{tpu_custom_call.1} parent=1 // pred_check_branch
      %37 = sbr.rel (0) target = $region17
    $region16: #{tpu_custom_call.1} parent=1 // pred_region
      %39 = dma.done [#allocation5], 2048
    $region17: #{tpu_custom_call.1} parent=1 // pred_fallthru
      _
    // Predicated region
    $region18: #{tpu_custom_call.1} parent=1 // pred_check
      _
    $region19: #{tpu_custom_call.1} parent=1 // pred_check_branch
      %41 = sbr.rel (0) target = $region21
    $region20: #{tpu_custom_call.1} parent=1 // pred_region
      %43 = dma.done [#allocation7], 16
    $region21: #{tpu_custom_call.1} parent=1 // pred_fallthru
      _
    %44 = sfence
    %v45 = vld [vmem:[#allocation4] sm:$0xff]
    %v46 = vld [vmem:[#allocation4 + $0x8] sm:$0xff]
    %v47 = vld [vmem:[#allocation4 + $0x10] sm:$0xff]
    %v48 = vld [vmem:[#allocation4 + $0x18] sm:$0xff]
    %v49 = vld [vmem:[#allocation4 + $0x20] sm:$0xff]
    %v50 = vld [vmem:[#allocation4 + $0x28] sm:$0xff]
    %v51 = vld [vmem:[#allocation4 + $0x30] sm:$0xff]
    %v52 = vld [vmem:[#allocation4 + $0x38] sm:$0xff]
    %v53 = vld [vmem:[#allocation4 + $0x40] sm:$0xff]
    %v54 = vld [vmem:[#allocation4 + $0x48] sm:$0xff]
    %v55 = vld [vmem:[#allocation4 + $0x50] sm:$0xff]
    %v56 = vld [vmem:[#allocation4 + $0x58] sm:$0xff]
    %v57 = vld [vmem:[#allocation4 + $0x60] sm:$0xff]
    %v58 = vld [vmem:[#allocation4 + $0x68] sm:$0xff]
    %v59 = vld [vmem:[#allocation4 + $0x70] sm:$0xff]
    %v60 = vld [vmem:[#allocation4 + $0x78] sm:$0xff]
    %v61 = vadd.f32 %v45, %v46
    %62 = vadd.xlane.f32.xlu0 %v61
    %v63 = vpop.xlane.xlu0 %62
    %v64 = vadd.f32 %v47, %v48
    %65 = vadd.xlane.f32.xlu0 %v64
    %v66 = vpop.xlane.xlu0 %65
    %v67 = vadd.f32 %v49, %v50
    %68 = vadd.xlane.f32.xlu0 %v67
    %v69 = vpop.xlane.xlu0 %68
    %v70 = vadd.f32 %v51, %v52
    %71 = vadd.xlane.f32.xlu0 %v70
    %v72 = vpop.xlane.xlu0 %71
    %v73 = vadd.f32 %v53, %v54
    %74 = vadd.xlane.f32.xlu0 %v73
    %v75 = vpop.xlane.xlu0 %74
    %v76 = vadd.f32 %v55, %v56
    %77 = vadd.xlane.f32.xlu0 %v76
    %v78 = vpop.xlane.xlu0 %77
    %v79 = vadd.f32 %v57, %v58
    %80 = vadd.xlane.f32.xlu0 %v79
    %v81 = vpop.xlane.xlu0 %80
    %v82 = vadd.f32 %v59, %v60
    %83 = vadd.xlane.f32.xlu0 %v82
    %v84 = vpop.xlane.xlu0 %83
    %v85 = vmul.f32 %v63, 0.00390625
    %v86 = vmul.f32 %v66, 0.00390625
    %v87 = vmul.f32 %v69, 0.00390625
    %v88 = vmul.f32 %v72, 0.00390625
    %v89 = vmul.f32 %v75, 0.00390625
    %v90 = vmul.f32 %v78, 0.00390625
    %v91 = vmul.f32 %v81, 0.00390625
    %v92 = vmul.f32 %v84, 0.00390625
    %vm93 = vcmask 7168
    %94 = vst.msk [vmem:[#allocation2] sm:$0xff] %vm93, 0.0
    %95 = vst.msk [vmem:[#allocation2 + $0x8] sm:$0xff] %vm93, 0.0
    %96 = vst.msk [vmem:[#allocation2 + $0x10] sm:$0xff] %vm93, 0.0
    %97 = vst.msk [vmem:[#allocation2 + $0x18] sm:$0xff] %vm93, 0.0
    %vm98 = vcmask 3072
    %99 = vst.msk [vmem:[#allocation2 + $0x20] sm:$0xf] %vm98, 0.0
    %100 = vst.msk [vmem:[#allocation2 + $0x28] sm:$0xff] %vm93, 0.0
    %101 = vst.msk [vmem:[#allocation2 + $0x30] sm:$0xff] %vm93, 0.0
    %102 = vst.msk [vmem:[#allocation2 + $0x38] sm:$0xff] %vm93, 0.0
    %103 = vst.msk [vmem:[#allocation2 + $0x40] sm:$0xff] %vm93, 0.0
    %104 = vst.msk [vmem:[#allocation2 + $0x48] sm:$0xf] %vm98, 0.0
    %105 = vst.msk [vmem:[#allocation2 + $0x2] sm:$0xff] %vm93, %v85
    %106 = vst.msk [vmem:[#allocation2 + $0xa] sm:$0xff] %vm93, %v86
    %107 = vst.msk [vmem:[#allocation2 + $0x12] sm:$0xff] %vm93, %v87
    %108 = vst.msk [vmem:[#allocation2 + $0x1a] sm:$0xff] %vm93, %v88
    %109 = vst.msk [vmem:[#allocation2 + $0x2a] sm:$0xff] %vm93, %v89
    %110 = vst.msk [vmem:[#allocation2 + $0x32] sm:$0xff] %vm93, %v90
    %111 = vst.msk [vmem:[#allocation2 + $0x3a] sm:$0xff] %vm93, %v91
    %112 = vst.msk [vmem:[#allocation2 + $0x42] sm:$0xff] %vm93, %v92
    %s113 = sld [smem:[#allocation3]]
    %v114 = vstv %s113
    %v115 = vadd.f32 %v114, 0.0
    %s116 = sld [smem:[#allocation8]]
    %v117 = vld [vmem:[#allocation2] sm:$0xff]
    %v118 = vld [vmem:[#allocation2 + $0x8] sm:$0xff]
    %v119 = vld [vmem:[#allocation2 + $0x10] sm:$0xff]
    %v120 = vld [vmem:[#allocation2 + $0x18] sm:$0xff]
    %v121 = vld [vmem:[#allocation2 + $0x28] sm:$0xff]
    %v122 = vld [vmem:[#allocation2 + $0x30] sm:$0xff]
    %v123 = vld [vmem:[#allocation2 + $0x38] sm:$0xff]
    %v124 = vld [vmem:[#allocation2 + $0x40] sm:$0xff]
    %v125 = vstv %s116
    %v126 = vmul.f32 %v125, %v117
    %v127 = vmul.f32 %v125, %v118
    %v128 = vmul.f32 %v125, %v119
    %v129 = vmul.f32 %v125, %v120
    %v130 = vmul.f32 %v125, %v121
    %v131 = vmul.f32 %v125, %v122
    %v132 = vmul.f32 %v125, %v123
    %v133 = vmul.f32 %v125, %v124
    %v134 = vadd.f32 %v115, %v126
    %v135 = vadd.f32 %v115, %v127
    %v136 = vadd.f32 %v115, %v128
    %v137 = vadd.f32 %v115, %v129
    %v138 = vadd.f32 %v115, %v130
    %v139 = vadd.f32 %v115, %v131
    %v140 = vadd.f32 %v115, %v132
    %v141 = vadd.f32 %v115, %v133
    %s142 = sld [smem:[#allocation8 + $0x1]]
    %v143 = vld [vmem:[#allocation2 + $0x1] sm:$0xff]
    %v144 = vld [vmem:[#allocation2 + $0x9] sm:$0xff]
    %v145 = vld [vmem:[#allocation2 + $0x11] sm:$0xff]
    %v146 = vld [vmem:[#allocation2 + $0x19] sm:$0xff]
    %v147 = vld [vmem:[#allocation2 + $0x29] sm:$0xff]
    %v148 = vld [vmem:[#allocation2 + $0x31] sm:$0xff]
    %v149 = vld [vmem:[#allocation2 + $0x39] sm:$0xff]
    %v150 = vld [vmem:[#allocation2 + $0x41] sm:$0xff]
    %v151 = vstv %s142
    %v152 = vmul.f32 %v151, %v143
    %v153 = vmul.f32 %v151, %v144
    %v154 = vmul.f32 %v151, %v145
    %v155 = vmul.f32 %v151, %v146
    %v156 = vmul.f32 %v151, %v147
    %v157 = vmul.f32 %v151, %v148
    %v158 = vmul.f32 %v151, %v149
    %v159 = vmul.f32 %v151, %v150
    %v160 = vadd.f32 %v134, %v152
    %v161 = vadd.f32 %v135, %v153
    %v162 = vadd.f32 %v136, %v154
    %v163 = vadd.f32 %v137, %v155
    %v164 = vadd.f32 %v138, %v156
    %v165 = vadd.f32 %v139, %v157
    %v166 = vadd.f32 %v140, %v158
    %v167 = vadd.f32 %v141, %v159
    %s168 = sld [smem:[#allocation8 + $0x2]]
    %v169 = vld [vmem:[#allocation2 + $0x2] sm:$0xff]
    %v170 = vld [vmem:[#allocation2 + $0xa] sm:$0xff]
    %v171 = vld [vmem:[#allocation2 + $0x12] sm:$0xff]
    %v172 = vld [vmem:[#allocation2 + $0x1a] sm:$0xff]
    %v173 = vld [vmem:[#allocation2 + $0x2a] sm:$0xff]
    %v174 = vld [vmem:[#allocation2 + $0x32] sm:$0xff]
    %v175 = vld [vmem:[#allocation2 + $0x3a] sm:$0xff]
    %v176 = vld [vmem:[#allocation2 + $0x42] sm:$0xff]
    %v177 = vstv %s168
    %v178 = vmul.f32 %v177, %v169
    %v179 = vmul.f32 %v177, %v170
    %v180 = vmul.f32 %v177, %v171
    %v181 = vmul.f32 %v177, %v172
    %v182 = vmul.f32 %v177, %v173
    %v183 = vmul.f32 %v177, %v174
    %v184 = vmul.f32 %v177, %v175
    %v185 = vmul.f32 %v177, %v176
    %v186 = vadd.f32 %v160, %v178
    %v187 = vadd.f32 %v161, %v179
    %v188 = vadd.f32 %v162, %v180
    %v189 = vadd.f32 %v163, %v181
    %v190 = vadd.f32 %v164, %v182
    %v191 = vadd.f32 %v165, %v183
    %v192 = vadd.f32 %v166, %v184
    %v193 = vadd.f32 %v167, %v185
    %s194 = sld [smem:[#allocation8 + $0x3]]
    %v195 = vld [vmem:[#allocation2 + $0x3] sm:$0xff]
    %v196 = vld [vmem:[#allocation2 + $0xb] sm:$0xff]
    %v197 = vld [vmem:[#allocation2 + $0x13] sm:$0xff]
    %v198 = vld [vmem:[#allocation2 + $0x1b] sm:$0xff]
    %v199 = vld [vmem:[#allocation2 + $0x2b] sm:$0xff]
    %v200 = vld [vmem:[#allocation2 + $0x33] sm:$0xff]
    %v201 = vld [vmem:[#allocation2 + $0x3b] sm:$0xff]
    %v202 = vld [vmem:[#allocation2 + $0x43] sm:$0xff]
    %v203 = vstv %s194
    %v204 = vmul.f32 %v203, %v195
    %v205 = vmul.f32 %v203, %v196
    %v206 = vmul.f32 %v203, %v197
    %v207 = vmul.f32 %v203, %v198
    %v208 = vmul.f32 %v203, %v199
    %v209 = vmul.f32 %v203, %v200
    %v210 = vmul.f32 %v203, %v201
    %v211 = vmul.f32 %v203, %v202
    %v212 = vadd.f32 %v186, %v204
    %v213 = vadd.f32 %v187, %v205
    %v214 = vadd.f32 %v188, %v206
    %v215 = vadd.f32 %v189, %v207
    %v216 = vadd.f32 %v190, %v208
    %v217 = vadd.f32 %v191, %v209
    %v218 = vadd.f32 %v192, %v210
    %v219 = vadd.f32 %v193, %v211
    %s220 = sld [smem:[#allocation8 + $0x4]]
    %v221 = vld [vmem:[#allocation2 + $0x4] sm:$0xff]
    %v222 = vld [vmem:[#allocation2 + $0xc] sm:$0xff]
    %v223 = vld [vmem:[#allocation2 + $0x14] sm:$0xff]
    %v224 = vld [vmem:[#allocation2 + $0x1c] sm:$0xff]
    %v225 = vld [vmem:[#allocation2 + $0x2c] sm:$0xff]
    %v226 = vld [vmem:[#allocation2 + $0x34] sm:$0xff]
    %v227 = vld [vmem:[#allocation2 + $0x3c] sm:$0xff]
    %v228 = vld [vmem:[#allocation2 + $0x44] sm:$0xff]
    %v229 = vstv %s220
    %v230 = vmul.f32 %v229, %v221
    %v231 = vmul.f32 %v229, %v222
    %v232 = vmul.f32 %v229, %v223
    %v233 = vmul.f32 %v229, %v224
    %v234 = vmul.f32 %v229, %v225
    %v235 = vmul.f32 %v229, %v226
    %v236 = vmul.f32 %v229, %v227
    %v237 = vmul.f32 %v229, %v228
    %v238 = vadd.f32 %v212, %v230
    %v239 = vadd.f32 %v213, %v231
    %v240 = vadd.f32 %v214, %v232
    %v241 = vadd.f32 %v215, %v233
    %v242 = vadd.f32 %v216, %v234
    %v243 = vadd.f32 %v217, %v235
    %v244 = vadd.f32 %v218, %v236
    %v245 = vadd.f32 %v219, %v237
    %v246 = vsub.f32 0.0, %v238
    %v247 = vsub.f32 0.0, %v239
    %v248 = vsub.f32 0.0, %v240
    %v249 = vsub.f32 0.0, %v241
    %v250 = vsub.f32 0.0, %v242
    %v251 = vsub.f32 0.0, %v243
    %v252 = vsub.f32 0.0, %v244
    %v253 = vsub.f32 0.0, %v245
    %v254 = vmul.f32 %v246, 1.442695
    %v255 = vpow.pop %v254
    %v256 = vmul.f32 %v247, 1.442695
    %v257 = vpow.pop %v256
    %v258 = vmul.f32 %v248, 1.442695
    %v259 = vpow.pop %v258
    %v260 = vmul.f32 %v249, 1.442695
    %v261 = vpow.pop %v260
    %v262 = vmul.f32 %v250, 1.442695
    %v263 = vpow.pop %v262
    %v264 = vmul.f32 %v251, 1.442695
    %v265 = vpow.pop %v264
    %v266 = vmul.f32 %v252, 1.442695
    %v267 = vpow.pop %v266
    %v268 = vmul.f32 %v253, 1.442695
    %v269 = vpow.pop %v268
    %v270 = vadd.f32 %v255, 1.0
    %v271 = vadd.f32 %v257, 1.0
    %v272 = vadd.f32 %v259, 1.0
    %v273 = vadd.f32 %v261, 1.0
    %v274 = vadd.f32 %v263, 1.0
    %v275 = vadd.f32 %v265, 1.0
    %v276 = vadd.f32 %v267, 1.0
    %v277 = vadd.f32 %v269, 1.0
    %v278 = vrcp.pop %v270
    %v279 = vmul.f32 %v270, %v278
    %v280 = vsub.f32 1.0, %v279
    %v281 = vmul.f32 %v278, %v280
    %v282 = vadd.f32 %v278, %v281
    %vm283 = vweird.f32 %v270
    %vm284 = vweird.f32 %v278
    %vm285 = vmor %vm283, %vm284
    %v286 = vsel %vm285, %v278, %v282
    %v287 = vand.u32 2147483647, %v270
    %vm288 = vcmp.eq.f32.partialorder %v287, 8.507059e+37
    %v289 = vand.u32 %v270, 2147483648
    %v290 = vor.u32 1.1754944e-38, %v289
    %v291 = vsel %vm288, %v290, %v286
    %v292 = vmul.f32 1.0, %v291
    %v293 = vrcp.pop %v271
    %v294 = vmul.f32 %v271, %v293
    %v295 = vsub.f32 1.0, %v294
    %v296 = vmul.f32 %v293, %v295
    %v297 = vadd.f32 %v293, %v296
    %vm298 = vweird.f32 %v271
    %vm299 = vweird.f32 %v293
    %vm300 = vmor %vm298, %vm299
    %v301 = vsel %vm300, %v293, %v297
    %v302 = vand.u32 2147483647, %v271
    %vm303 = vcmp.eq.f32.partialorder %v302, 8.507059e+37
    %v304 = vand.u32 %v271, 2147483648
    %v305 = vor.u32 1.1754944e-38, %v304
    %v306 = vsel %vm303, %v305, %v301
    %v307 = vmul.f32 1.0, %v306
    %v308 = vrcp.pop %v272
    %v309 = vmul.f32 %v272, %v308
    %v310 = vsub.f32 1.0, %v309
    %v311 = vmul.f32 %v308, %v310
    %v312 = vadd.f32 %v308, %v311
    %vm313 = vweird.f32 %v272
    %vm314 = vweird.f32 %v308
    %vm315 = vmor %vm313, %vm314
    %v316 = vsel %vm315, %v308, %v312
    %v317 = vand.u32 2147483647, %v272
    %vm318 = vcmp.eq.f32.partialorder %v317, 8.507059e+37
    %v319 = vand.u32 %v272, 2147483648
    %v320 = vor.u32 1.1754944e-38, %v319
    %v321 = vsel %vm318, %v320, %v316
    %v322 = vmul.f32 1.0, %v321
    %v323 = vrcp.pop %v273
    %v324 = vmul.f32 %v273, %v323
    %v325 = vsub.f32 1.0, %v324
    %v326 = vmul.f32 %v323, %v325
    %v327 = vadd.f32 %v323, %v326
    %vm328 = vweird.f32 %v273
    %vm329 = vweird.f32 %v323
    %vm330 = vmor %vm328, %vm329
    %v331 = vsel %vm330, %v323, %v327
    %v332 = vand.u32 2147483647, %v273
    %vm333 = vcmp.eq.f32.partialorder %v332, 8.507059e+37
    %v334 = vand.u32 %v273, 2147483648
    %v335 = vor.u32 1.1754944e-38, %v334
    %v336 = vsel %vm333, %v335, %v331
    %v337 = vmul.f32 1.0, %v336
    %v338 = vrcp.pop %v274
    %v339 = vmul.f32 %v274, %v338
    %v340 = vsub.f32 1.0, %v339
    %v341 = vmul.f32 %v338, %v340
    %v342 = vadd.f32 %v338, %v341
    %vm343 = vweird.f32 %v274
    %vm344 = vweird.f32 %v338
    %vm345 = vmor %vm343, %vm344
    %v346 = vsel %vm345, %v338, %v342
    %v347 = vand.u32 2147483647, %v274
    %vm348 = vcmp.eq.f32.partialorder %v347, 8.507059e+37
    %v349 = vand.u32 %v274, 2147483648
    %v350 = vor.u32 1.1754944e-38, %v349
    %v351 = vsel %vm348, %v350, %v346
    %v352 = vmul.f32 1.0, %v351
    %v353 = vrcp.pop %v275
    %v354 = vmul.f32 %v275, %v353
    %v355 = vsub.f32 1.0, %v354
    %v356 = vmul.f32 %v353, %v355
    %v357 = vadd.f32 %v353, %v356
    %vm358 = vweird.f32 %v275
    %vm359 = vweird.f32 %v353
    %vm360 = vmor %vm358, %vm359
    %v361 = vsel %vm360, %v353, %v357
    %v362 = vand.u32 2147483647, %v275
    %vm363 = vcmp.eq.f32.partialorder %v362, 8.507059e+37
    %v364 = vand.u32 %v275, 2147483648
    %v365 = vor.u32 1.1754944e-38, %v364
    %v366 = vsel %vm363, %v365, %v361
    %v367 = vmul.f32 1.0, %v366
    %v368 = vrcp.pop %v276
    %v369 = vmul.f32 %v276, %v368
    %v370 = vsub.f32 1.0, %v369
    %v371 = vmul.f32 %v368, %v370
    %v372 = vadd.f32 %v368, %v371
    %vm373 = vweird.f32 %v276
    %vm374 = vweird.f32 %v368
    %vm375 = vmor %vm373, %vm374
    %v376 = vsel %vm375, %v368, %v372
    %v377 = vand.u32 2147483647, %v276
    %vm378 = vcmp.eq.f32.partialorder %v377, 8.507059e+37
    %v379 = vand.u32 %v276, 2147483648
    %v380 = vor.u32 1.1754944e-38, %v379
    %v381 = vsel %vm378, %v380, %v376
    %v382 = vmul.f32 1.0, %v381
    %v383 = vrcp.pop %v277
    %v384 = vmul.f32 %v277, %v383
    %v385 = vsub.f32 1.0, %v384
    %v386 = vmul.f32 %v383, %v385
    %v387 = vadd.f32 %v383, %v386
    %vm388 = vweird.f32 %v277
    %vm389 = vweird.f32 %v383
    %vm390 = vmor %vm388, %vm389
    %v391 = vsel %vm390, %v383, %v387
    %v392 = vand.u32 2147483647, %v277
    %vm393 = vcmp.eq.f32.partialorder %v392, 8.507059e+37
    %v394 = vand.u32 %v277, 2147483648
    %v395 = vor.u32 1.1754944e-38, %v394
    %v396 = vsel %vm393, %v395, %v391
    %v397 = vmul.f32 1.0, %v396
    %v398 = vld [vmem:[#allocation4] sm:$0xff]
    %v399 = vld [vmem:[#allocation4 + $0x8] sm:$0xff]
    %v400 = vld [vmem:[#allocation4 + $0x10] sm:$0xff]
    %v401 = vld [vmem:[#allocation4 + $0x18] sm:$0xff]
    %v402 = vld [vmem:[#allocation4 + $0x20] sm:$0xff]
    %v403 = vld [vmem:[#allocation4 + $0x28] sm:$0xff]
    %v404 = vld [vmem:[#allocation4 + $0x30] sm:$0xff]
    %v405 = vld [vmem:[#allocation4 + $0x38] sm:$0xff]
    %v406 = vld [vmem:[#allocation4 + $0x40] sm:$0xff]
    %v407 = vld [vmem:[#allocation4 + $0x48] sm:$0xff]
    %v408 = vld [vmem:[#allocation4 + $0x50] sm:$0xff]
    %v409 = vld [vmem:[#allocation4 + $0x58] sm:$0xff]
    %v410 = vld [vmem:[#allocation4 + $0x60] sm:$0xff]
    %v411 = vld [vmem:[#allocation4 + $0x68] sm:$0xff]
    %v412 = vld [vmem:[#allocation4 + $0x70] sm:$0xff]
    %v413 = vld [vmem:[#allocation4 + $0x78] sm:$0xff]
    %415 = vset.pattern.permute.xlu0 0
    %416 = vperm.xlu0 %415, %v292
    %v417 = vpop.permute.xlu0 %416
    %420 = vset.pattern.permute.xlu0 0
    %421 = vperm.xlu0 %420, %v307
    %v422 = vpop.permute.xlu0 %421
    %425 = vset.pattern.permute.xlu0 0
    %426 = vperm.xlu0 %425, %v322
    %v427 = vpop.permute.xlu0 %426
    %430 = vset.pattern.permute.xlu0 0
    %431 = vperm.xlu0 %430, %v337
    %v432 = vpop.permute.xlu0 %431
    %435 = vset.pattern.permute.xlu0 0
    %436 = vperm.xlu0 %435, %v352
    %v437 = vpop.permute.xlu0 %436
    %440 = vset.pattern.permute.xlu0 0
    %441 = vperm.xlu0 %440, %v367
    %v442 = vpop.permute.xlu0 %441
    %445 = vset.pattern.permute.xlu0 0
    %446 = vperm.xlu0 %445, %v382
    %v447 = vpop.permute.xlu0 %446
    %450 = vset.pattern.permute.xlu0 0
    %451 = vperm.xlu0 %450, %v397
    %v452 = vpop.permute.xlu0 %451
    %v454 = vmul.f32 %v398, %v417
    %v455 = vmul.f32 %v399, %v417
    %v456 = vmul.f32 %v400, %v422
    %v457 = vmul.f32 %v401, %v422
    %v458 = vmul.f32 %v402, %v427
    %v459 = vmul.f32 %v403, %v427
    %v460 = vmul.f32 %v404, %v432
    %v461 = vmul.f32 %v405, %v432
    %v462 = vmul.f32 %v406, %v437
    %v463 = vmul.f32 %v407, %v437
    %v464 = vmul.f32 %v408, %v442
    %v465 = vmul.f32 %v409, %v442
    %v466 = vmul.f32 %v410, %v447
    %v467 = vmul.f32 %v411, %v447
    %v468 = vmul.f32 %v412, %v452
    %v469 = vmul.f32 %v413, %v452
    %470 = vst [vmem:[#allocation9] sm:$0xff] %v454
    %471 = vst [vmem:[#allocation9 + $0x8] sm:$0xff] %v455
    %472 = vst [vmem:[#allocation9 + $0x10] sm:$0xff] %v456
    %473 = vst [vmem:[#allocation9 + $0x18] sm:$0xff] %v457
    %474 = vst [vmem:[#allocation9 + $0x20] sm:$0xff] %v458
    %475 = vst [vmem:[#allocation9 + $0x28] sm:$0xff] %v459
    %476 = vst [vmem:[#allocation9 + $0x30] sm:$0xff] %v460
    %477 = vst [vmem:[#allocation9 + $0x38] sm:$0xff] %v461
    %478 = vst [vmem:[#allocation9 + $0x40] sm:$0xff] %v462
    %479 = vst [vmem:[#allocation9 + $0x48] sm:$0xff] %v463
    %480 = vst [vmem:[#allocation9 + $0x50] sm:$0xff] %v464
    %481 = vst [vmem:[#allocation9 + $0x58] sm:$0xff] %v465
    %482 = vst [vmem:[#allocation9 + $0x60] sm:$0xff] %v466
    %483 = vst [vmem:[#allocation9 + $0x68] sm:$0xff] %v467
    %484 = vst [vmem:[#allocation9 + $0x70] sm:$0xff] %v468
    %485 = vst [vmem:[#allocation9 + $0x78] sm:$0xff] %v469
    // Predicated region
    $region22: #{tpu_custom_call.1} parent=1 // pred_check
      _
    $region23: #{tpu_custom_call.1} parent=1 // pred_check_branch
      %487 = sbr.rel (0) target = $region25
    $region24: #{tpu_custom_call.1} parent=1 // pred_region
      %489 = vsyncadd [#allocation6], 0
      %s490 = sshll.u32 [#allocation9], 4
      %s491 = int_to_ptr.vmem [resolvable:$true] %s490
      %s492 = sshll.u32 %s3, 4
      %s493 = int_to_ptr.hbm [resolvable:$true] %s492
      %498 = dma.vmem_to_hbm [thread:$0]  %s491, 2048, %s493, [#allocation6], 256, 256, 16
    $region25: #{tpu_custom_call.1} parent=1 // pred_fallthru
      _
    // Predicated region
    $region26: #{tpu_custom_call.1} parent=1 // pred_check
      _
    $region27: #{tpu_custom_call.1} parent=1 // pred_check_branch
      %500 = sbr.rel (0) target = $region29
    $region28: #{tpu_custom_call.1} parent=1 // pred_region
      %502 = dma.done [#allocation6], 2048
    $region29: #{tpu_custom_call.1} parent=1 // pred_fallthru
      _
    %503 = vsyncpa [#allocation5], 1
    %504 = vsyncpa [#allocation6], 1
    %505 = vsyncpa [#allocation7], 1

</llo_original>
